<compile_context>
chip_gen: v5e
topology: v5e:2x2
jax: 0.10.0
libtpu: 0.0.40
codegen_flags: <defaults>
</compile_context>

<pallas_src>
import functools

import jax
import jax.numpy as jnp
from jax.experimental import pallas as pl
from jax.experimental.pallas import tpu as pltpu


# ----------------------------------------------------------------------------
# Kernel: fc1 -> ReLU -> fc2 -> ReLU -> folded dueling head
# ----------------------------------------------------------------------------
def dueling_q_kernel(x_ref, w1_ref, b1_ref, w2_ref, b2_ref, wq_ref, bq_ref,
                     q_ref):
    # Cast activations to the MXU dtype in-kernel (VPU cast, data already in
    # VMEM) and accumulate every matmul in f32.
    x = x_ref[...].astype(w1_ref.dtype)

    # fc1 + ReLU
    h1 = jnp.dot(x, w1_ref[...], preferred_element_type=jnp.float32)
    h1 = jnp.maximum(h1 + b1_ref[...], 0.0)

    # fc2 + ReLU
    h2 = jnp.dot(h1.astype(w2_ref.dtype), w2_ref[...],
                 preferred_element_type=jnp.float32)
    h2 = jnp.maximum(h2 + b2_ref[...], 0.0)

    # Folded dueling head: Q = h2 @ Wq + bq  (single matmul, no XLU reduce)
    q = jnp.dot(h2.astype(wq_ref.dtype), wq_ref[...],
                preferred_element_type=jnp.float32)
    q_ref[...] = (q + bq_ref[...]).astype(q_ref.dtype)


# ----------------------------------------------------------------------------
# Wrapper: head folding, dtype handling, batch tiling
# ----------------------------------------------------------------------------
def _fold_and_cast(params, mxu_dtype):
    """Fold V/A heads + mean-subtraction into one [FC2, n_actions] head."""
    wq = params["wv"] + (params["wa"]
                         - jnp.mean(params["wa"], axis=1, keepdims=True))
    bq = params["bv"] + (params["ba"]
                         - jnp.mean(params["ba"], axis=1, keepdims=True))
    return {
        "w1": params["w1"].astype(mxu_dtype),
        "b1": params["b1"].astype(jnp.float32),
        "w2": params["w2"].astype(mxu_dtype),
        "b2": params["b2"].astype(jnp.float32),
        "wq": wq.astype(mxu_dtype),
        "bq": bq.astype(jnp.float32),
    }


@functools.partial(jax.jit, static_argnames=("tb", "mxu_dtype"))
def dueling_q_forward(state, params, *, tb=1024, mxu_dtype=jnp.bfloat16):
    """state: [B, input_dim] float32. params: dict of [in, out] weights."""
    B, D = state.shape
    fp = _fold_and_cast(params, mxu_dtype)
    F1 = fp["w1"].shape[1]
    F2 = fp["w2"].shape[1]
    A = fp["wq"].shape[1]

    # Batch tile: full batch for small B (block == full dims is always legal),
    # otherwise TB rows with zero-padding to a whole number of tiles.
    tb_eff = B if B <= tb else tb
    n_blocks = pl.cdiv(B, tb_eff)
    b_pad = n_blocks * tb_eff
    x = state
    if b_pad != B:
        x = jnp.pad(x, ((0, b_pad - B), (0, 0)))

    const = lambda i: (0, 0)  # weights/biases stay VMEM-resident across steps

    flops = 2 * b_pad * (D * F1 + F1 * F2 + F2 * A)
    bytes_accessed = int(
        b_pad * D * 4                                            # state (f32)
        + sum(int(v.size) * v.dtype.itemsize for v in fp.values())
        + b_pad * A * 4                                          # Q out (f32)
    )

    q = pl.pallas_call(
        dueling_q_kernel,
        out_shape=jax.ShapeDtypeStruct((b_pad, A), jnp.float32),
        grid=(n_blocks,),
        in_specs=[
            pl.BlockSpec((tb_eff, D), lambda i: (i, 0)),   # state: tiled batch
            pl.BlockSpec((D, F1), const),
            pl.BlockSpec((1, F1), const),
            pl.BlockSpec((F1, F2), const),
            pl.BlockSpec((1, F2), const),
            pl.BlockSpec((F2, A), const),
            pl.BlockSpec((1, A), const),
        ],
        out_specs=pl.BlockSpec((tb_eff, A), lambda i: (i, 0)),
        compiler_params=pltpu.CompilerParams(
            dimension_semantics=("parallel",)),  # v7x: shard batch over 2 TCs
        cost_estimate=pl.CostEstimate(
            flops=flops, transcendentals=0, bytes_accessed=bytes_accessed),
    )(x, fp["w1"], fp["b1"], fp["w2"], fp["b2"], fp["wq"], fp["bq"])

    return q[:B]


# ----------------------------------------------------------------------------
# Parameter init + references
# ----------------------------------------------------------------------------
def init_params(key, input_dim, fc1_dims, fc2_dims, n_actions):
    """PyTorch-style uniform(-1/sqrt(fan_in), +1/sqrt(fan_in)) init.

    Weights are stored [in, out] (transposed vs nn.Linear) so the kernel
    computes y = x @ W + b directly; semantics are identical to x @ W.T + b.
    """
    ks = jax.random.split(key, 8)

    def lin(kw, kb, fan_in, fan_out):
        bound = 1.0 / jnp.sqrt(jnp.float32(fan_in))
        w = jax.random.uniform(kw, (fan_in, fan_out), jnp.float32, -bound, bound)
        b = jax.random.uniform(kb, (1, fan_out), jnp.float32, -bound, bound)
        return w, b

    w1, b1 = lin(ks[0], ks[1], input_dim, fc1_dims)
    w2, b2 = lin(ks[2], ks[3], fc1_dims, fc2_dims)
    wv, bv = lin(ks[4], ks[5], fc2_dims, 1)
    wa, ba = lin(ks[6], ks[7], fc2_dims, n_actions)
    return dict(w1=w1, b1=b1, w2=w2, b2=b2, wv=wv, bv=bv, wa=wa, ba=ba)


def dueling_q_ref_f32(state, p):
    """Pure-f32 pure-JAX reference of the PyTorch forward (un-folded)."""
    h1 = jnp.maximum(state @ p["w1"] + p["b1"], 0.0)
    h2 = jnp.maximum(h1 @ p["w2"] + p["b2"], 0.0)
    v = h2 @ p["wv"] + p["bv"]
    a = h2 @ p["wa"] + p["ba"]
    return v + (a - jnp.mean(a, axis=1, keepdims=True))


def dueling_q_ref_matched(state, p, mxu_dtype=jnp.bfloat16):
    """Reference with the same folded head + bf16/f32 mixed precision."""
    fp = _fold_and_cast(p, mxu_dtype)
    x = state.astype(mxu_dtype)
    h1 = jnp.maximum(
        jnp.dot(x, fp["w1"], preferred_element_type=jnp.float32) + fp["b1"], 0.0)
    h2 = jnp.maximum(
        jnp.dot(h1.astype(mxu_dtype), fp["w2"],
                preferred_element_type=jnp.float32) + fp["b2"], 0.0)
    return jnp.dot(h2.astype(mxu_dtype), fp["wq"],
                   preferred_element_type=jnp.float32) + fp["bq"]


# ----------------------------------------------------------------------------
# Demo / self-test
# ----------------------------------------------------------------------------
if __name__ == "__main__":
    # Small shapes consistent with the module.
    B, INPUT_DIM, FC1, FC2, N_ACTIONS = 2, 16, 32, 32, 4

    key = jax.random.PRNGKey(0)
    k_state, k_params, k_big, k_rag = jax.random.split(key, 4)

    state = jax.random.normal(k_state, (B, INPUT_DIM), jnp.float32)
    params = init_params(k_params, INPUT_DIM, FC1, FC2, N_ACTIONS)

    # Small-batch path (single grid step, block == full array).
    q = jax.block_until_ready(dueling_q_forward(state, params))
    assert q.shape == (B, N_ACTIONS)
    assert jnp.allclose(q, dueling_q_ref_matched(state, params),
                        atol=1e-3, rtol=1e-3)
    assert jnp.allclose(q, dueling_q_ref_f32(state, params),
                        atol=5e-2, rtol=5e-2)

    # Large-batch path: pipelined batch grid with VMEM-resident weights.
    BIG_B = 1024
    big_state = jax.random.normal(k_big, (BIG_B, INPUT_DIM), jnp.float32)
    q_big = jax.block_until_ready(dueling_q_forward(big_state, params))
    assert q_big.shape == (BIG_B, N_ACTIONS)
    assert jnp.allclose(q_big, dueling_q_ref_matched(big_state, params),
                        atol=1e-3, rtol=1e-3)
    assert jnp.allclose(q_big, dueling_q_ref_f32(big_state, params),
                        atol=5e-2, rtol=5e-2)

    # Ragged batch: exercises multi-block grid + zero-padding of the last tile.
    RAG_B = 1300
    rag_state = jax.random.normal(k_rag, (RAG_B, INPUT_DIM), jnp.float32)
    q_rag = jax.block_until_ready(
        dueling_q_forward(rag_state, params, tb=512))
    assert q_rag.shape == (RAG_B, N_ACTIONS)
    assert jnp.allclose(q_rag, dueling_q_ref_matched(rag_state, params),
                        atol=1e-3, rtol=1e-3)

    print("KERNEL_OK")
</pallas_src>

<mosaic_0001>
module attributes {stable_mosaic.version = 11 : i64} {
  func.func @dueling_q_kernel(%arg0: i32, %arg1: memref<2x16xf32, #tpu.memory_space<vmem>>, %arg2: memref<16x32xbf16, #tpu.memory_space<vmem>>, %arg3: memref<1x32xf32, #tpu.memory_space<vmem>>, %arg4: memref<32x32xbf16, #tpu.memory_space<vmem>>, %arg5: memref<1x32xf32, #tpu.memory_space<vmem>>, %arg6: memref<32x4xbf16, #tpu.memory_space<vmem>>, %arg7: memref<1x4xf32, #tpu.memory_space<vmem>>, %arg8: memref<2x4xf32, #tpu.memory_space<vmem>>) attributes {dimension_semantics = [#tpu.dimension_semantics<parallel>], iteration_bounds = array<i64: 1>, scalar_prefetch = 0 : i64, scratch_operands = 0 : i64, tpu.core_type = #tpu.core_type<tc>, window_params = [{transform_indices = @transform_0, window_bounds = array<i64: 2, 16>}, {pipeline_mode = #tpu.pipeline_mode<synchronous>, transform_indices = @transform_1, window_bounds = array<i64: 16, 32>}, {pipeline_mode = #tpu.pipeline_mode<synchronous>, transform_indices = @transform_2, window_bounds = array<i64: 1, 32>}, {pipeline_mode = #tpu.pipeline_mode<synchronous>, transform_indices = @transform_3, window_bounds = array<i64: 32, 32>}, {pipeline_mode = #tpu.pipeline_mode<synchronous>, transform_indices = @transform_4, window_bounds = array<i64: 1, 32>}, {pipeline_mode = #tpu.pipeline_mode<synchronous>, transform_indices = @transform_5, window_bounds = array<i64: 32, 4>}, {pipeline_mode = #tpu.pipeline_mode<synchronous>, transform_indices = @transform_6, window_bounds = array<i64: 1, 4>}, {transform_indices = @transform_7, window_bounds = array<i64: 2, 4>}]} {
    %c0 = arith.constant 0 : index
    %c0_0 = arith.constant 0 : index
    %0 = vector.load %arg1[%c0, %c0_0] : memref<2x16xf32, #tpu.memory_space<vmem>>, vector<2x16xf32>
    %1 = arith.truncf %0 : vector<2x16xf32> to vector<2x16xbf16>
    %c0_1 = arith.constant 0 : index
    %c0_2 = arith.constant 0 : index
    %2 = vector.load %arg2[%c0_1, %c0_2] : memref<16x32xbf16, #tpu.memory_space<vmem>>, vector<16x32xbf16>
    %cst = arith.constant dense<0.000000e+00> : vector<2x32xf32>
    %3 = tpu.matmul %1, %2, %cst {dimension_numbers = #tpu.dot_dimension_numbers<[1], [0], [0], [1], [0, 0, 1, 1], [], []>} : vector<2x16xbf16>, vector<16x32xbf16>, vector<2x32xf32> -> vector<2x32xf32>
    %c0_3 = arith.constant 0 : index
    %c0_4 = arith.constant 0 : index
    %4 = vector.load %arg3[%c0_3, %c0_4] : memref<1x32xf32, #tpu.memory_space<vmem>>, vector<1x32xf32>
    %5 = vector.broadcast %4 : vector<1x32xf32> to vector<2x32xf32>
    %6 = arith.addf %3, %5 : vector<2x32xf32>
    %cst_5 = arith.constant 0.000000e+00 : f32
    %7 = vector.broadcast %cst_5 : f32 to vector<2x32xf32>
    %8 = arith.maximumf %6, %7 : vector<2x32xf32>
    %9 = arith.truncf %8 : vector<2x32xf32> to vector<2x32xbf16>
    %c0_6 = arith.constant 0 : index
    %c0_7 = arith.constant 0 : index
    %10 = vector.load %arg4[%c0_6, %c0_7] : memref<32x32xbf16, #tpu.memory_space<vmem>>, vector<32x32xbf16>
    %cst_8 = arith.constant dense<0.000000e+00> : vector<2x32xf32>
    %11 = tpu.matmul %9, %10, %cst_8 {dimension_numbers = #tpu.dot_dimension_numbers<[1], [0], [0], [1], [0, 0, 1, 1], [], []>} : vector<2x32xbf16>, vector<32x32xbf16>, vector<2x32xf32> -> vector<2x32xf32>
    %c0_9 = arith.constant 0 : index
    %c0_10 = arith.constant 0 : index
    %12 = vector.load %arg5[%c0_9, %c0_10] : memref<1x32xf32, #tpu.memory_space<vmem>>, vector<1x32xf32>
    %13 = vector.broadcast %12 : vector<1x32xf32> to vector<2x32xf32>
    %14 = arith.addf %11, %13 : vector<2x32xf32>
    %cst_11 = arith.constant 0.000000e+00 : f32
    %15 = vector.broadcast %cst_11 : f32 to vector<2x32xf32>
    %16 = arith.maximumf %14, %15 : vector<2x32xf32>
    %17 = arith.truncf %16 : vector<2x32xf32> to vector<2x32xbf16>
    %c0_12 = arith.constant 0 : index
    %c0_13 = arith.constant 0 : index
    %18 = vector.load %arg6[%c0_12, %c0_13] : memref<32x4xbf16, #tpu.memory_space<vmem>>, vector<32x4xbf16>
    %cst_14 = arith.constant dense<0.000000e+00> : vector<2x4xf32>
    %19 = tpu.matmul %17, %18, %cst_14 {dimension_numbers = #tpu.dot_dimension_numbers<[1], [0], [0], [1], [0, 0, 1, 1], [], []>} : vector<2x32xbf16>, vector<32x4xbf16>, vector<2x4xf32> -> vector<2x4xf32>
    %c0_15 = arith.constant 0 : index
    %c0_16 = arith.constant 0 : index
    %20 = vector.load %arg7[%c0_15, %c0_16] : memref<1x4xf32, #tpu.memory_space<vmem>>, vector<1x4xf32>
    %21 = vector.broadcast %20 : vector<1x4xf32> to vector<2x4xf32>
    %22 = arith.addf %19, %21 : vector<2x4xf32>
    %c0_17 = arith.constant 0 : index
    %c0_18 = arith.constant 0 : index
    %23 = vector.load %arg8[%c0_17, %c0_18] : memref<2x4xf32, #tpu.memory_space<vmem>>, vector<2x4xf32>
    tpu.vector_store %arg8[%c0_17, %c0_18], %22 {strides = array<i32>} : memref<2x4xf32, #tpu.memory_space<vmem>>, vector<2x4xf32>,
    return
  }
  func.func @transform_0(%arg0: i32) -> (i32, i32) {
    %c0_i32 = arith.constant 0 : i32
    %c0_i32_0 = arith.constant 0 : i32
    return %arg0, %c0_i32 : i32, i32
  }
  func.func @transform_1(%arg0: i32) -> (i32, i32) {
    %c0_i32 = arith.constant 0 : i32
    %c0_i32_0 = arith.constant 0 : i32
    %c0_i32_1 = arith.constant 0 : i32
    return %c0_i32, %c0_i32_0 : i32, i32
  }
  func.func @transform_2(%arg0: i32) -> (i32, i32) {
    %c0_i32 = arith.constant 0 : i32
    %c0_i32_0 = arith.constant 0 : i32
    %c0_i32_1 = arith.constant 0 : i32
    return %c0_i32, %c0_i32_0 : i32, i32
  }
  func.func @transform_3(%arg0: i32) -> (i32, i32) {
    %c0_i32 = arith.constant 0 : i32
    %c0_i32_0 = arith.constant 0 : i32
    %c0_i32_1 = arith.constant 0 : i32
    return %c0_i32, %c0_i32_0 : i32, i32
  }
  func.func @transform_4(%arg0: i32) -> (i32, i32) {
    %c0_i32 = arith.constant 0 : i32
    %c0_i32_0 = arith.constant 0 : i32
    %c0_i32_1 = arith.constant 0 : i32
    return %c0_i32, %c0_i32_0 : i32, i32
  }
  func.func @transform_5(%arg0: i32) -> (i32, i32) {
    %c0_i32 = arith.constant 0 : i32
    %c0_i32_0 = arith.constant 0 : i32
    %c0_i32_1 = arith.constant 0 : i32
    return %c0_i32, %c0_i32_0 : i32, i32
  }
  func.func @transform_6(%arg0: i32) -> (i32, i32) {
    %c0_i32 = arith.constant 0 : i32
    %c0_i32_0 = arith.constant 0 : i32
    %c0_i32_1 = arith.constant 0 : i32
    return %c0_i32, %c0_i32_0 : i32, i32
  }
  func.func @transform_7(%arg0: i32) -> (i32, i32) {
    %c0_i32 = arith.constant 0 : i32
    %c0_i32_0 = arith.constant 0 : i32
    return %arg0, %c0_i32 : i32, i32
  }
}

</mosaic_0001>

<llo_original>
// kernel: dueling_q_forward.1
$region0: #{dueling_q_forward.1}
  #allocation0 [shape = 'u32[]', space=smem, size = 0x4, offset = 0x4, fixed_abs, tag = 'smem constant byte address 0x4 - core index']
  #allocation1 [shape = 'u32[72,128]{1,0:T(1,128)}', space=vmem, size = 0x9000, scoped, tag = 'internal scratch']
  %s0 = inlined_call_operand.vmem [shape: f32[2,16], index: 0, kind: input, shape index: {}]
  %s1 = inlined_call_operand.vmem [shape: bf16[16,32], index: 1, kind: input, shape index: {}]
  %s2 = inlined_call_operand.vmem [shape: f32[1,32], index: 2, kind: input, shape index: {}]
  %s3 = inlined_call_operand.vmem [shape: bf16[32,32], index: 3, kind: input, shape index: {}]
  %s4 = inlined_call_operand.vmem [shape: f32[1,32], index: 4, kind: input, shape index: {}]
  %s5 = inlined_call_operand.vmem [shape: bf16[32,4], index: 5, kind: input, shape index: {}]
  %s6 = inlined_call_operand.vmem [shape: f32[1,4], index: 6, kind: input, shape index: {}]
  %s7 = inlined_call_operand.hbm [shape: f32[2,4], index: 7, kind: output, shape index: {}]
  %s8 = sld [smem:[#allocation0]]
  $region38: #{dueling_q_forward.1} parent=0
    _
  %s10 = ssub.s32 1, %s8
  %s11 = scalar_select 0, %s10, %s8
  $region1: #{dueling_q_forward.1} parent=0
    #allocation2 [shape = 'u8[1024]{0}', space=vmem, size = 0x400, scoped, tag = 'output window, operand 0, single buffered']
    #allocation3 [shape = 's32[1]{0}', space=sflag, size = 0x4, scoped, tag = 'scoped memory for dueling_q_forward.1']
    %12 = vsyncpa [#allocation3], 0
    // Predicated region
    $region2: #{dueling_q_forward.1} parent=1 // pred_check
      _
    $region3: #{dueling_q_forward.1} parent=1 // pred_check_branch
      %14 = sbr.rel (0) target = $region5
    $region4: #{dueling_q_forward.1} parent=1 // pred_region
      _
    $region5: #{dueling_q_forward.1} parent=1 // pred_fallthru
      _
    // Predicated region
    $region6: #{dueling_q_forward.1} parent=1 // pred_check
      _
    $region7: #{dueling_q_forward.1} parent=1 // pred_check_branch
      %16 = sbr.rel (0) target = $region9
    $region8: #{dueling_q_forward.1} parent=1 // pred_region
      _
    $region9: #{dueling_q_forward.1} parent=1 // pred_fallthru
      _
    // Predicated region
    $region10: #{dueling_q_forward.1} parent=1 // pred_check
      _
    $region11: #{dueling_q_forward.1} parent=1 // pred_check_branch
      %18 = sbr.rel (0) target = $region13
    $region12: #{dueling_q_forward.1} parent=1 // pred_region
      _
    $region13: #{dueling_q_forward.1} parent=1 // pred_fallthru
      _
    // Predicated region
    $region14: #{dueling_q_forward.1} parent=1 // pred_check
      _
    $region15: #{dueling_q_forward.1} parent=1 // pred_check_branch
      %20 = sbr.rel (0) target = $region17
    $region16: #{dueling_q_forward.1} parent=1 // pred_region
      _
    $region17: #{dueling_q_forward.1} parent=1 // pred_fallthru
      _
    // Predicated region
    $region18: #{dueling_q_forward.1} parent=1 // pred_check
      _
    $region19: #{dueling_q_forward.1} parent=1 // pred_check_branch
      %22 = sbr.rel (0) target = $region21
    $region20: #{dueling_q_forward.1} parent=1 // pred_region
      _
    $region21: #{dueling_q_forward.1} parent=1 // pred_fallthru
      _
    // Predicated region
    $region22: #{dueling_q_forward.1} parent=1 // pred_check
      _
    $region23: #{dueling_q_forward.1} parent=1 // pred_check_branch
      %24 = sbr.rel (0) target = $region25
    $region24: #{dueling_q_forward.1} parent=1 // pred_region
      _
    $region25: #{dueling_q_forward.1} parent=1 // pred_fallthru
      _
    // Predicated region
    $region26: #{dueling_q_forward.1} parent=1 // pred_check
      _
    $region27: #{dueling_q_forward.1} parent=1 // pred_check_branch
      %26 = sbr.rel (0) target = $region29
    $region28: #{dueling_q_forward.1} parent=1 // pred_region
      _
    $region29: #{dueling_q_forward.1} parent=1 // pred_fallthru
      _
    %v28 = vld [vmem:[%s0] sm:$0x3]
    %v29 = vpack.c.bf16 %v28, %v28
    %v30 = vld [vmem:[%s1] sm:$0xf]
    %v31 = vld [vmem:[%s1 + $0x4] sm:$0xf]
    %v32 = vld [vmem:[%s2] sm:$0x1]
    %v34 = vperm.slane %v32, 0
    %v38 = vunpack.c.l.b16 %v30
    %v39 = vunpack.c.l.b16 %v31
    %v40 = vpack.c.b16 %v39, %v38
    %vm42 = vcmask 130048
    %v44 = vsel %vm42, %v29, 0
    %46 = vmatpush.bf16.msra.mxu0 0
    %47 = vmatpush.bf16.msra.mxu0 0
    %48 = vmatpush.bf16.msra.mxu0 0
    %49 = vmatpush.bf16.msra.mxu0 0
    %50 = vmatpush.bf16.msra.mxu0 0
    %51 = vmatpush.bf16.msra.mxu0 0
    %52 = vmatpush.bf16.msra.mxu0 0
    %53 = vmatpush.bf16.msra.mxu0 %v40
    %54 = vmatmul.bf16.gmra.mxu0 %v44
    %v55 = vpop.f32.mrf.mxu0
    %v56 = vadd.f32 %v34, %v55
    %v57 = vpop.f32.mrf.mxu0
    %58 = vdwg.mxu0
    %v59 = vmax.f32 %v56, 0.0
    %v60 = vpack.c.bf16 %v59, %v59
    %v61 = vld [vmem:[%s3] sm:$0xf]
    %v62 = vld [vmem:[%s3 + $0x4] sm:$0xf]
    %v63 = vld [vmem:[%s3 + $0x8] sm:$0xf]
    %v64 = vld [vmem:[%s3 + $0xc] sm:$0xf]
    %v65 = vld [vmem:[%s4] sm:$0x1]
    %v67 = vperm.slane %v65, 0
    %v73 = vunpack.c.l.b16 %v61
    %v74 = vunpack.c.l.b16 %v62
    %v75 = vunpack.c.l.b16 %v63
    %v76 = vunpack.c.l.b16 %v64
    %v77 = vpack.c.b16 %v74, %v73
    %v78 = vpack.c.b16 %v76, %v75
    %vm81 = vcmask 261120
    %v83 = vsel %vm81, %v60, 0
    %85 = vmatpush.bf16.msra.mxu0 0
    %86 = vmatpush.bf16.msra.mxu0 0
    %87 = vmatpush.bf16.msra.mxu0 0
    %88 = vmatpush.bf16.msra.mxu0 0
    %89 = vmatpush.bf16.msra.mxu0 0
    %90 = vmatpush.bf16.msra.mxu0 0
    %91 = vmatpush.bf16.msra.mxu0 %v78
    %92 = vmatpush.bf16.msra.mxu0 %v77
    %93 = vmatmul.bf16.gmra.mxu0 %v83
    %v94 = vpop.f32.mrf.mxu0
    %v95 = vadd.f32 %v67, %v94
    %v96 = vpop.f32.mrf.mxu0
    %97 = vdwg.mxu0
    %v98 = vmax.f32 %v95, 0.0
    %v99 = vpack.c.bf16 %v98, %v98
    %v100 = vld [vmem:[%s5] sm:$0xf]
    %v101 = vld [vmem:[%s5 + $0x4] sm:$0xf]
    %v102 = vld [vmem:[%s5 + $0x8] sm:$0xf]
    %v103 = vld [vmem:[%s5 + $0xc] sm:$0xf]
    %v104 = vld [vmem:[%s6] sm:$0x1]
    %v106 = vperm.slane %v104, 0
    %v112 = vunpack.c.l.b16 %v100
    %v113 = vunpack.c.l.b16 %v101
    %v114 = vunpack.c.l.b16 %v102
    %v115 = vunpack.c.l.b16 %v103
    %v116 = vpack.c.b16 %v113, %v112
    %v117 = vpack.c.b16 %v115, %v114
    %v121 = vsel %vm81, %v99, 0
    %123 = vmatpush.bf16.msra.mxu0 0
    %124 = vmatpush.bf16.msra.mxu0 0
    %125 = vmatpush.bf16.msra.mxu0 0
    %126 = vmatpush.bf16.msra.mxu0 0
    %127 = vmatpush.bf16.msra.mxu0 0
    %128 = vmatpush.bf16.msra.mxu0 0
    %129 = vmatpush.bf16.msra.mxu0 %v117
    %130 = vmatpush.bf16.msra.mxu0 %v116
    %131 = vmatmul.bf16.gmra.mxu0 %v121
    %v132 = vpop.f32.mrf.mxu0
    %v133 = vadd.f32 %v106, %v132
    %v134 = vpop.f32.mrf.mxu0
    %135 = vdwg.mxu0
    %vm136 = vcmask 25600
    %137 = vst.msk [vmem:[#allocation2] sm:$0x3] %vm136, %v133
    // Predicated region
    $region30: #{dueling_q_forward.1} parent=1 // pred_check
      _
    $region31: #{dueling_q_forward.1} parent=1 // pred_check_branch
      %139 = sbr.rel (0) target = $region33
    $region32: #{dueling_q_forward.1} parent=1 // pred_region
      %141 = vsyncadd [#allocation3], 0
      %s143 = sshll.u32 [#allocation2], 4
      %s144 = int_to_ptr.vmem [resolvable:$true] %s143
      %s145 = sshll.u32 %s7, 4
      %s146 = int_to_ptr.hbm [resolvable:$true] %s145
      %148 = dma.vmem_to_hbm [thread:$0]  %s144, 32, %s146, [#allocation3]
    $region33: #{dueling_q_forward.1} parent=1 // pred_fallthru
      _
    // Predicated region
    $region34: #{dueling_q_forward.1} parent=1 // pred_check
      _
    $region35: #{dueling_q_forward.1} parent=1 // pred_check_branch
      %150 = sbr.rel (0) target = $region37
    $region36: #{dueling_q_forward.1} parent=1 // pred_region
      %152 = dma.done [#allocation3], 32
    $region37: #{dueling_q_forward.1} parent=1 // pred_fallthru
      _
    %153 = vsyncpa [#allocation3], 1

</llo_original>
